<compile_context>
chip_gen: v7x
topology: tpu7x:2x2x1
jax: 0.10.0
libtpu: 0.0.40
codegen_flags: <defaults>
</compile_context>

<pallas_src>
import jax
import jax.numpy as jnp
import numpy as np
from jax import lax
from jax.experimental import pallas as pl
from jax.experimental.pallas import tpu as pltpu  # noqa: F401  (TPU backend)

# ----------------------------- model config ---------------------------------
B, H, W, C = 2, 16, 16, 4        # batch, spatial, input channels
S = H * W                        # pixels per image
HIDDEN = 32                      # 1x1 conv output channels
NUM_CLASSES = 8                  # classifier classes (softmax dim=1)
SCALE_INP = True                 # matches scale_inp=True
C_AUG = 8                        # channels padded to 8 (4 data + 1 ones(bias) + 3 zero)


def inference_kernel(xt_ref, params_ref, out_ref):
    """Fused (preprocess+bias folded) 1x1-conv + ReLU + avgpool + linear + softmax.

    Layouts (pixel axis B*S = 512 = 4*128 on the lane axis):
      xt_ref    : [C_AUG, B*S]      f32  rows 0..C-1 image channels, row C ones, rest 0
      params_ref: [2*HIDDEN+1, PW]  f32  rows [0:H)=W1_aug (preproc+bias folded),
                                          rows [H:2H)=W2, row 2H = b2
      out_ref   : [B, K]            f32  softmax probabilities
    """
    c_aug, bs = xt_ref.shape
    batch, k = out_ref.shape
    s = bs // batch
    hidden = (params_ref.shape[0] - 1) // 2

    # Static views into the single packed parameter slab (one DMA total).
    w1_aug = params_ref[0:hidden, 0:c_aug]                 # [HIDDEN, C_AUG]
    w2 = params_ref[hidden:2 * hidden, 0:k]                # [HIDDEN, K]
    b2 = params_ref[2 * hidden:2 * hidden + 1, 0:k]        # [1, K]

    # 1x1 conv + bias as ONE MXU matmul (bias rides on the ones row of xt);
    # output [HIDDEN, B*S] stays lane-dense.
    ht = jnp.dot(w1_aug, xt_ref[...], preferred_element_type=jnp.float32)
    ht = jnp.maximum(ht, 0.0)                              # ReLU

    # Global average pool on the MXU. The block-diagonal averaging matrix is
    # generated in-kernel from iota (no HBM read, no extra DMA):
    #   p[b, i] = 1/S  if pixel i belongs to batch b else 0.
    col = lax.broadcasted_iota(jnp.int32, (batch, bs), 1)
    row = lax.broadcasted_iota(jnp.int32, (batch, bs), 0)
    in_block = (col >= row * s) & (col < (row + 1) * s)
    p = jnp.where(in_block, jnp.float32(1.0 / s), jnp.float32(0.0))
    pooled = lax.dot_general(p, ht, (((1,), (1,)), ((), ())),
                             preferred_element_type=jnp.float32)   # [B, HIDDEN]

    # Classifier head.
    logits = jnp.dot(pooled, w2, preferred_element_type=jnp.float32) + b2  # [B, K]

    # Softmax over dim=1 (class axis), numerically stable. Exact reciprocal
    # kept to hold the 1e-5 check (approx=True -> EUP slot at production size).
    m = jnp.max(logits, axis=-1, keepdims=True)
    e = jnp.exp(logits - m)
    denom = jnp.sum(e, axis=-1, keepdims=True)
    out_ref[...] = e * pl.reciprocal(denom, approx=False)


def make_inference_fn(mean, std, w1, b1, w2, b2, scale_inp=SCALE_INP):
    """Build the inference callable.

    All constant parameter transforms happen HERE, once:
      xn = (x*inv255 - mean)/std  =>  x @ w1_eff + b1_eff
      w1_eff[c,f] = w1[c,f] * inv255 / std[c]
      b1_eff[f]   = b1[f] - sum_c (mean[c]/std[c]) * w1[c,f]
    b1_eff is folded into the conv matmul as an extra weight column paired
    with a ones row appended to the input, and everything is packed into a
    single VMEM param slab.
    """
    c, hidden = w1.shape
    k = w2.shape[1]
    assert c + 1 <= C_AUG

    inv255 = (1.0 / 255.0) if scale_inp else 1.0
    scale = inv255 / std[0]                                        # [C]
    w1_eff_t = (w1 * scale[:, None]).T                             # [HIDDEN, C]
    b1_eff = b1[0] - (mean[0] / std[0]) @ w1                       # [HIDDEN]

    # Augmented first-layer weights: [HIDDEN, C_AUG] = [w1_eff | b1_eff | 0].
    w1_aug = jnp.zeros((hidden, C_AUG), jnp.float32)
    w1_aug = w1_aug.at[:, :c].set(w1_eff_t)
    w1_aug = w1_aug.at[:, c].set(b1_eff)

    # Pack w1_aug / w2 / b2 into one slab [2*HIDDEN+1, PW] -> a single DMA.
    pw = max(C_AUG, k)
    pad_cols = lambda a: jnp.pad(a.astype(jnp.float32),
                                 ((0, 0), (0, pw - a.shape[1])))
    slab = jnp.concatenate([pad_cols(w1_aug), pad_cols(w2), pad_cols(b2)],
                           axis=0)                                 # [2H+1, PW]

    @jax.jit
    def infer(x_nhwc):
        """x_nhwc: [B, H, W, C] float32 raw image values in [0, 255]."""
        b, h, w_, c_ = x_nhwc.shape
        s = h * w_
        bs = b * s

        # Lane-dense input layout [C_AUG, B*S]: pixels on the lane axis,
        # channels on sublanes, a ones row for the fused bias, zero padding
        # up to C_AUG.  Fuses with the pallas_call under jit (layout plumbing).
        xt = x_nhwc.astype(jnp.float32).reshape(bs, c_).T          # [C, B*S]
        xt_aug = jnp.concatenate(
            [xt,
             jnp.ones((1, bs), jnp.float32),
             jnp.zeros((C_AUG - c_ - 1, bs), jnp.float32)], axis=0)  # [C_AUG, B*S]

        full = lambda shape: pl.BlockSpec(shape, lambda: (0,) * len(shape))
        return pl.pallas_call(
            inference_kernel,
            out_shape=jax.ShapeDtypeStruct((b, k), jnp.float32),
            grid=(),
            in_specs=[full(xt_aug.shape), full(slab.shape)],
            out_specs=full((b, k)),
        )(xt_aug, slab)

    return infer


def reference(x_nhwc, mean, std, w1, b1, w2, b2):
    """Unfused reference matching the original PyTorch forward() semantics."""
    x = x_nhwc / 255.0 if SCALE_INP else x_nhwc
    xn = (x - mean[0]) / std[0]                                    # per-channel
    hmap = jnp.maximum(jnp.einsum('bhwc,cf->bhwf', xn, w1) + b1[0], 0.0)
    pooled = jnp.mean(hmap, axis=(1, 2))
    logits = pooled @ w2 + b2[0]
    return jax.nn.softmax(logits, axis=1)


if __name__ == "__main__":
    key = jax.random.PRNGKey(0)
    kx, kw1, kb1, kw2, kb2 = jax.random.split(key, 5)

    # Input image batch in [0, 255] (scale_inp=True semantics).
    x = jax.random.uniform(kx, (B, H, W, C), jnp.float32, 0.0, 255.0)

    # Deterministic "buffers" and model parameters.
    mean = jnp.array([[0.485, 0.456, 0.406, 0.5]], dtype=jnp.float32)   # [1, C]
    std = jnp.array([[0.229, 0.224, 0.225, 0.25]], dtype=jnp.float32)   # [1, C]
    w1 = jax.random.normal(kw1, (C, HIDDEN), jnp.float32) * 0.1
    b1 = jax.random.normal(kb1, (1, HIDDEN), jnp.float32) * 0.01
    w2 = jax.random.normal(kw2, (HIDDEN, NUM_CLASSES), jnp.float32) * 0.1
    b2 = jax.random.normal(kb2, (1, NUM_CLASSES), jnp.float32) * 0.01

    # Build once (constant transforms hoisted), call per-input.
    infer = make_inference_fn(mean, std, w1, b1, w2, b2, scale_inp=SCALE_INP)
    out = jax.block_until_ready(infer(x))

    ref = jax.block_until_ready(reference(x, mean, std, w1, b1, w2, b2))
    np.testing.assert_allclose(np.asarray(out), np.asarray(ref),
                               rtol=1e-5, atol=1e-5)
    assert out.shape == (B, NUM_CLASSES)
    np.testing.assert_allclose(np.asarray(out).sum(axis=1), np.ones(B),
                               rtol=1e-5, atol=1e-5)
    print("KERNEL_OK")
</pallas_src>

<mosaic_0001>
module attributes {stable_mosaic.version = 11 : i64} {
  func.func @inference_kernel(%arg0: memref<8x512xf32, #tpu.memory_space<vmem>>, %arg1: memref<65x8xf32, #tpu.memory_space<vmem>>, %arg2: memref<2x8xf32, #tpu.memory_space<vmem>>) attributes {dimension_semantics = [], scalar_prefetch = 0 : i64, scratch_operands = 0 : i64, tpu.core_type = #tpu.core_type<tc>} {
    %c0 = arith.constant 0 : index
    %c0_0 = arith.constant 0 : index
    %0 = vector.load %arg1[%c0, %c0_0] : memref<65x8xf32, #tpu.memory_space<vmem>>, vector<32x8xf32>
    %c32 = arith.constant 32 : index
    %c0_1 = arith.constant 0 : index
    %1 = vector.load %arg1[%c32, %c0_1] : memref<65x8xf32, #tpu.memory_space<vmem>>, vector<32x8xf32>
    %c64 = arith.constant 64 : index
    %c0_2 = arith.constant 0 : index
    %2 = vector.load %arg1[%c64, %c0_2] : memref<65x8xf32, #tpu.memory_space<vmem>>, vector<1x8xf32>
    %c0_3 = arith.constant 0 : index
    %c0_4 = arith.constant 0 : index
    %3 = vector.load %arg0[%c0_3, %c0_4] : memref<8x512xf32, #tpu.memory_space<vmem>>, vector<8x512xf32>
    %cst = arith.constant dense<0.000000e+00> : vector<32x512xf32>
    %4 = tpu.matmul %0, %3, %cst {dimension_numbers = #tpu.dot_dimension_numbers<[1], [0], [0], [1], [0, 0, 1, 1], [], []>} : vector<32x8xf32>, vector<8x512xf32>, vector<32x512xf32> -> vector<32x512xf32>
    %cst_5 = arith.constant 0.000000e+00 : f32
    %5 = vector.broadcast %cst_5 : f32 to vector<32x512xf32>
    %6 = arith.maximumf %4, %5 : vector<32x512xf32>
    %7 = tpu.iota {dimensions = array<i32: 1>} : vector<2x512xi32>
    %8 = tpu.iota {dimensions = array<i32: 0>} : vector<2x512xi32>
    %c256_i32 = arith.constant 256 : i32
    %9 = vector.broadcast %c256_i32 : i32 to vector<2x512xi32>
    %10 = arith.muli %8, %9 : vector<2x512xi32>
    %11 = arith.cmpi sge, %7, %10 : vector<2x512xi32>
    %c1_i32 = arith.constant 1 : i32
    %12 = vector.broadcast %c1_i32 : i32 to vector<2x512xi32>
    %13 = arith.addi %8, %12 : vector<2x512xi32>
    %c256_i32_6 = arith.constant 256 : i32
    %14 = vector.broadcast %c256_i32_6 : i32 to vector<2x512xi32>
    %15 = arith.muli %13, %14 : vector<2x512xi32>
    %16 = arith.cmpi slt, %7, %15 : vector<2x512xi32>
    %17 = arith.andi %11, %16 : vector<2x512xi1>
    %cst_7 = arith.constant 3.906250e-03 : f32
    %cst_8 = arith.constant 0.000000e+00 : f32
    %18 = vector.broadcast %cst_7 : f32 to vector<2x512xf32>
    %19 = vector.broadcast %cst_8 : f32 to vector<2x512xf32>
    %20 = arith.select %17, %18, %19 : vector<2x512xi1>, vector<2x512xf32>
    %cst_9 = arith.constant dense<0.000000e+00> : vector<2x32xf32>
    %21 = tpu.matmul %20, %6, %cst_9 {dimension_numbers = #tpu.dot_dimension_numbers<[1], [1], [0], [0], [0, 0, 1, 0], [], []>} : vector<2x512xf32>, vector<32x512xf32>, vector<2x32xf32> -> vector<2x32xf32>
    %cst_10 = arith.constant dense<0.000000e+00> : vector<2x8xf32>
    %22 = tpu.matmul %21, %1, %cst_10 {dimension_numbers = #tpu.dot_dimension_numbers<[1], [0], [0], [1], [0, 0, 1, 1], [], []>} : vector<2x32xf32>, vector<32x8xf32>, vector<2x8xf32> -> vector<2x8xf32>
    %23 = vector.broadcast %2 : vector<1x8xf32> to vector<2x8xf32>
    %24 = arith.addf %22, %23 : vector<2x8xf32>
    %cst_11 = arith.constant dense<0xFF800000> : vector<2xf32>
    %25 = vector.multi_reduction <maximumf>, %24, %cst_11 [1] : vector<2x8xf32> to vector<2xf32>
    %26 = vector.shape_cast %25 : vector<2xf32> to vector<2x1xf32>
    %27 = vector.broadcast %26 : vector<2x1xf32> to vector<2x8xf32>
    %28 = arith.subf %24, %27 : vector<2x8xf32>
    %29 = math.exp %28 : vector<2x8xf32>
    %cst_12 = arith.constant dense<0.000000e+00> : vector<2xf32>
    %30 = vector.multi_reduction <add>, %29, %cst_12 [1] : vector<2x8xf32> to vector<2xf32>
    %31 = vector.shape_cast %30 : vector<2xf32> to vector<2x1xf32>
    %32 = tpu.reciprocal %31 : vector<2x1xf32> -> vector<2x1xf32>
    %33 = vector.broadcast %32 : vector<2x1xf32> to vector<2x8xf32>
    %34 = arith.mulf %29, %33 : vector<2x8xf32>
    %c0_13 = arith.constant 0 : index
    %c0_14 = arith.constant 0 : index
    %35 = vector.load %arg2[%c0_13, %c0_14] : memref<2x8xf32, #tpu.memory_space<vmem>>, vector<2x8xf32>
    tpu.vector_store %arg2[%c0_13, %c0_14], %34 {strides = array<i32>} : memref<2x8xf32, #tpu.memory_space<vmem>>, vector<2x8xf32>,
    return
  }
}

</mosaic_0001>

<llo_original>
// kernel: infer.1
$region0: #{infer.1}
  #allocation0 [shape = 'u32[]', space=smem, size = 0x4, offset = 0x4, fixed_abs, tag = 'smem constant byte address 0x4 - core index']
  #allocation1 [shape = 'u32[144,128]{1,0:T(1,128)}', space=vmem, size = 0x12000, scoped, tag = 'internal scratch']
  %s0 = inlined_call_operand.vmem [shape: f32[8,512], index: 0, kind: input, shape index: {}]
  %s1 = inlined_call_operand.vmem [shape: f32[65,8], index: 1, kind: input, shape index: {}]
  %s2 = inlined_call_operand.hbm [shape: f32[2,8], index: 2, kind: output, shape index: {}]
  %s3 = sld [smem:[#allocation0]]
  $region18: #{infer.1} parent=0
    _
  %s5 = ssub.s32 1, %s3
  %s6 = scalar_select 0, %s5, %s3
  $region1: #{infer.1} parent=0
    #allocation2 [shape = 'u8[1024]{0}', space=vmem, size = 0x400, scoped, tag = 'output window, operand 0, single buffered']
    #allocation3 [shape = 's32[1]{0}', space=sflag, size = 0x4, scoped, tag = 'scoped memory for infer.1']
    %7 = vsyncpa [#allocation3], 0
    // Predicated region
    $region2: #{infer.1} parent=1 // pred_check
      _
    $region3: #{infer.1} parent=1 // pred_check_branch
      %9 = sbr.rel (0) target = $region5
    $region4: #{infer.1} parent=1 // pred_region
      _
    $region5: #{infer.1} parent=1 // pred_fallthru
      _
    // Predicated region
    $region6: #{infer.1} parent=1 // pred_check
      _
    $region7: #{infer.1} parent=1 // pred_check_branch
      %11 = sbr.rel (0) target = $region9
    $region8: #{infer.1} parent=1 // pred_region
      _
    $region9: #{infer.1} parent=1 // pred_fallthru
      _
    %v12 = vld [vmem:[%s1] sm:$0xff]
    %v13 = vld [vmem:[%s1 + $0x8] sm:$0xff]
    %v14 = vld [vmem:[%s1 + $0x10] sm:$0xff]
    %v15 = vld [vmem:[%s1 + $0x18] sm:$0xff]
    %v16 = vld [vmem:[%s1 + $0x20] sm:$0xff]
    %v17 = vld [vmem:[%s1 + $0x28] sm:$0xff]
    %v18 = vld [vmem:[%s1 + $0x30] sm:$0xff]
    %v19 = vld [vmem:[%s1 + $0x38] sm:$0xff]
    %v20 = vld [vmem:[%s1 + $0x40] sm:$0x1]
    %v21 = vld [vmem:[%s0] sm:$0xff]
    %v22 = vld [vmem:[%s0 + $0x8] sm:$0xff]
    %v23 = vld [vmem:[%s0 + $0x10] sm:$0xff]
    %v24 = vld [vmem:[%s0 + $0x18] sm:$0xff]
    %vm25 = vcmask 64512
    %v27 = vsel %vm25, %v12, 0
    %v30 = vsel %vm25, %v13, 0
    %v33 = vsel %vm25, %v14, 0
    %v36 = vsel %vm25, %v15, 0
    %38 = vmatprep.subr.mxu0 %v22
    %39 = vmatpush1.msra.mxu0 %v21
    %40 = vmatprep.subr.mxu0 0.0
    %41 = vmatpush1.msra.mxu0 0.0
    %42 = vmatprep.subr.mxu0 0.0
    %43 = vmatpush1.msra.mxu0 0.0
    %44 = vmatprep.subr.mxu0 0.0
    %45 = vmatpush1.msra.mxu0 0.0
    %46 = vmatprep.subr.mxu0 0.0
    %47 = vmatpush1.msra.mxu0 0.0
    %48 = vmatprep.subr.mxu0 0.0
    %49 = vmatpush1.msra.mxu0 0.0
    %50 = vmatprep.subr.mxu0 0.0
    %51 = vmatpush1.msra.mxu0 0.0
    %52 = vmatprep.subr.mxu0 0.0
    %53 = vmatpush1.msra.mxu0 0.0
    %54 = vmatprep.subr.mxu0 0.0
    %55 = vmatpush1.msra.mxu0 0.0
    %56 = vmatprep.subr.mxu0 0.0
    %57 = vmatpush1.msra.mxu0 0.0
    %58 = vmatprep.subr.mxu0 0.0
    %59 = vmatpush1.msra.mxu0 0.0
    %60 = vmatprep.subr.mxu0 0.0
    %61 = vmatpush1.msra.mxu0 0.0
    %62 = vmatprep.subr.mxu0 0.0
    %63 = vmatpush1.msra.mxu0 0.0
    %64 = vmatprep.subr.mxu0 0.0
    %65 = vmatpush1.msra.mxu0 0.0
    %66 = vmatprep.subr.mxu0 0.0
    %67 = vmatpush1.msra.mxu0 0.0
    %68 = vmatprep.subr.mxu0 0.0
    %69 = vmatpush1.msra.mxu0 0.0
    %70 = vmatprep.subr.mxu0 0.0
    %71 = vmatpush1.msra.mxu0 0.0
    %72 = vmatprep.subr.mxu0 0.0
    %73 = vmatpush1.msra.mxu0 0.0
    %74 = vmatprep.subr.mxu0 0.0
    %75 = vmatpush1.msra.mxu0 0.0
    %76 = vmatprep.subr.mxu0 0.0
    %77 = vmatpush1.msra.mxu0 0.0
    %78 = vmatprep.subr.mxu0 0.0
    %79 = vmatpush1.msra.mxu0 0.0
    %80 = vmatprep.subr.mxu0 0.0
    %81 = vmatpush1.msra.mxu0 0.0
    %82 = vmatprep.subr.mxu0 0.0
    %83 = vmatpush1.msra.mxu0 0.0
    %84 = vmatprep.subr.mxu0 0.0
    %85 = vmatpush1.msra.mxu0 0.0
    %86 = vmatprep.subr.mxu0 0.0
    %87 = vmatpush1.msra.mxu0 0.0
    %88 = vmatprep.subr.mxu0 0.0
    %89 = vmatpush1.msra.mxu0 0.0
    %90 = vmatprep.subr.mxu0 0.0
    %91 = vmatpush1.msra.mxu0 0.0
    %92 = vmatprep.subr.mxu0 0.0
    %93 = vmatpush1.msra.mxu0 0.0
    %94 = vmatprep.subr.mxu0 0.0
    %95 = vmatpush1.msra.mxu0 0.0
    %96 = vmatprep.subr.mxu0 0.0
    %97 = vmatpush1.msra.mxu0 0.0
    %98 = vmatprep.subr.mxu0 0.0
    %99 = vmatpush1.msra.mxu0 0.0
    %100 = vmatprep.subr.mxu0 0.0
    %101 = vmatpush1.msra.mxu0 0.0
    %102 = vmatprep.mubr.f32.mxu0 0.0
    %103 = vmatmul.mubr.f32.gmra.mrb[0].mxu0 %v27
    %v104 = vpop.f32.mrb[0].mxu0
    %v105 = vadd.f32 0.0, %v104
    %v106 = vpop.f32.mrb[0].mxu0
    %v107 = vadd.f32 0.0, %v106
    %108 = vmatprep.mubr.f32.mxu0 0.0
    %109 = vmatmul.mubr.f32.gmra.mrb[0].mxu0 %v30
    %v110 = vpop.f32.mrb[0].mxu0
    %v111 = vadd.f32 0.0, %v110
    %v112 = vpop.f32.mrb[0].mxu0
    %v113 = vadd.f32 0.0, %v112
    %114 = vmatprep.mubr.f32.mxu0 0.0
    %115 = vmatmul.mubr.f32.gmra.mrb[0].mxu0 %v33
    %v116 = vpop.f32.mrb[0].mxu0
    %v117 = vadd.f32 0.0, %v116
    %v118 = vpop.f32.mrb[0].mxu0
    %v119 = vadd.f32 0.0, %v118
    %120 = vmatprep.mubr.f32.mxu0 0.0
    %121 = vmatmul.mubr.f32.gmra.mrb[0].mxu0 %v36
    %v122 = vpop.f32.mrb[0].mxu0
    %v123 = vadd.f32 0.0, %v122
    %v124 = vpop.f32.mrb[0].mxu0
    %v125 = vadd.f32 0.0, %v124
    %126 = vdwg.mxu0
    %127 = vmatprep.subr.mxu0 %v24
    %128 = vmatpush1.msra.mxu0 %v23
    %129 = vmatprep.subr.mxu0 0.0
    %130 = vmatpush1.msra.mxu0 0.0
    %131 = vmatprep.subr.mxu0 0.0
    %132 = vmatpush1.msra.mxu0 0.0
    %133 = vmatprep.subr.mxu0 0.0
    %134 = vmatpush1.msra.mxu0 0.0
    %135 = vmatprep.subr.mxu0 0.0
    %136 = vmatpush1.msra.mxu0 0.0
    %137 = vmatprep.subr.mxu0 0.0
    %138 = vmatpush1.msra.mxu0 0.0
    %139 = vmatprep.subr.mxu0 0.0
    %140 = vmatpush1.msra.mxu0 0.0
    %141 = vmatprep.subr.mxu0 0.0
    %142 = vmatpush1.msra.mxu0 0.0
    %143 = vmatprep.subr.mxu0 0.0
    %144 = vmatpush1.msra.mxu0 0.0
    %145 = vmatprep.subr.mxu0 0.0
    %146 = vmatpush1.msra.mxu0 0.0
    %147 = vmatprep.subr.mxu0 0.0
    %148 = vmatpush1.msra.mxu0 0.0
    %149 = vmatprep.subr.mxu0 0.0
    %150 = vmatpush1.msra.mxu0 0.0
    %151 = vmatprep.subr.mxu0 0.0
    %152 = vmatpush1.msra.mxu0 0.0
    %153 = vmatprep.subr.mxu0 0.0
    %154 = vmatpush1.msra.mxu0 0.0
    %155 = vmatprep.subr.mxu0 0.0
    %156 = vmatpush1.msra.mxu0 0.0
    %157 = vmatprep.subr.mxu0 0.0
    %158 = vmatpush1.msra.mxu0 0.0
    %159 = vmatprep.subr.mxu0 0.0
    %160 = vmatpush1.msra.mxu0 0.0
    %161 = vmatprep.subr.mxu0 0.0
    %162 = vmatpush1.msra.mxu0 0.0
    %163 = vmatprep.subr.mxu0 0.0
    %164 = vmatpush1.msra.mxu0 0.0
    %165 = vmatprep.subr.mxu0 0.0
    %166 = vmatpush1.msra.mxu0 0.0
    %167 = vmatprep.subr.mxu0 0.0
    %168 = vmatpush1.msra.mxu0 0.0
    %169 = vmatprep.subr.mxu0 0.0
    %170 = vmatpush1.msra.mxu0 0.0
    %171 = vmatprep.subr.mxu0 0.0
    %172 = vmatpush1.msra.mxu0 0.0
    %173 = vmatprep.subr.mxu0 0.0
    %174 = vmatpush1.msra.mxu0 0.0
    %175 = vmatprep.subr.mxu0 0.0
    %176 = vmatpush1.msra.mxu0 0.0
    %177 = vmatprep.subr.mxu0 0.0
    %178 = vmatpush1.msra.mxu0 0.0
    %179 = vmatprep.subr.mxu0 0.0
    %180 = vmatpush1.msra.mxu0 0.0
    %181 = vmatprep.subr.mxu0 0.0
    %182 = vmatpush1.msra.mxu0 0.0
    %183 = vmatprep.subr.mxu0 0.0
    %184 = vmatpush1.msra.mxu0 0.0
    %185 = vmatprep.subr.mxu0 0.0
    %186 = vmatpush1.msra.mxu0 0.0
    %187 = vmatprep.subr.mxu0 0.0
    %188 = vmatpush1.msra.mxu0 0.0
    %189 = vmatprep.subr.mxu0 0.0
    %190 = vmatpush1.msra.mxu0 0.0
    %191 = vmatprep.mubr.f32.mxu0 0.0
    %192 = vmatmul.mubr.f32.gmra.mrb[0].mxu0 %v27
    %v193 = vpop.f32.mrb[0].mxu0
    %v194 = vadd.f32 0.0, %v193
    %v195 = vpop.f32.mrb[0].mxu0
    %v196 = vadd.f32 0.0, %v195
    %197 = vmatprep.mubr.f32.mxu0 0.0
    %198 = vmatmul.mubr.f32.gmra.mrb[0].mxu0 %v30
    %v199 = vpop.f32.mrb[0].mxu0
    %v200 = vadd.f32 0.0, %v199
    %v201 = vpop.f32.mrb[0].mxu0
    %v202 = vadd.f32 0.0, %v201
    %203 = vmatprep.mubr.f32.mxu0 0.0
    %204 = vmatmul.mubr.f32.gmra.mrb[0].mxu0 %v33
    %v205 = vpop.f32.mrb[0].mxu0
    %v206 = vadd.f32 0.0, %v205
    %v207 = vpop.f32.mrb[0].mxu0
    %v208 = vadd.f32 0.0, %v207
    %209 = vmatprep.mubr.f32.mxu0 0.0
    %210 = vmatmul.mubr.f32.gmra.mrb[0].mxu0 %v36
    %v211 = vpop.f32.mrb[0].mxu0
    %v212 = vadd.f32 0.0, %v211
    %v213 = vpop.f32.mrb[0].mxu0
    %v214 = vadd.f32 0.0, %v213
    %215 = vdwg.mxu0
    %v216 = vmax.f32 %v105, 0.0
    %v217 = vmax.f32 %v107, 0.0
    %v218 = vmax.f32 %v194, 0.0
    %v219 = vmax.f32 %v196, 0.0
    %v220 = vmax.f32 %v111, 0.0
    %v221 = vmax.f32 %v113, 0.0
    %v222 = vmax.f32 %v200, 0.0
    %v223 = vmax.f32 %v202, 0.0
    %v224 = vmax.f32 %v117, 0.0
    %v225 = vmax.f32 %v119, 0.0
    %v226 = vmax.f32 %v206, 0.0
    %v227 = vmax.f32 %v208, 0.0
    %v228 = vmax.f32 %v123, 0.0
    %v229 = vmax.f32 %v125, 0.0
    %v230 = vmax.f32 %v212, 0.0
    %v231 = vmax.f32 %v214, 0.0
    %v232 = vlaneseq
    %v233 = vand.u32 %v232, 127
    %v234 = vadd.s32 %v233, 128
    %v235 = vadd.s32 %v233, 256
    %v236 = vadd.s32 %v233, 384
    %v237 = vlaneseq
    %v238 = vshrl.u32 %v237, 7
    %v239 = vmul.u32 %v238, 256
    %vm240 = vcmp.ge.s32.totalorder %v233, %v239
    %vm241 = vcmp.ge.s32.totalorder %v234, %v239
    %vm242 = vcmp.ge.s32.totalorder %v235, %v239
    %vm243 = vcmp.ge.s32.totalorder %v236, %v239
    %v244 = vadd.s32 %v238, 1
    %v245 = vmul.u32 %v244, 256
    %vm246 = vcmp.lt.s32.totalorder %v233, %v245
    %vm247 = vcmp.lt.s32.totalorder %v234, %v245
    %vm248 = vcmp.lt.s32.totalorder %v235, %v245
    %vm249 = vcmp.lt.s32.totalorder %v236, %v245
    %vm250 = vmand %vm240, %vm246
    %vm251 = vmand %vm241, %vm247
    %vm252 = vmand %vm242, %vm248
    %vm253 = vmand %vm243, %vm249
    %v254 = vsel %vm250, 0.00390625, 0.0
    %v255 = vsel %vm251, 0.00390625, 0.0
    %v256 = vsel %vm252, 0.00390625, 0.0
    %v257 = vsel %vm253, 0.00390625, 0.0
    %258 = vmatprep.subr.mxu0 %v217
    %259 = vmatpush1.xpose.msra.mxu0 %v216
    %260 = vmatprep.subr.mxu0 %v221
    %261 = vmatpush1.xpose.msra.mxu0 %v220
    %262 = vmatprep.subr.mxu0 %v225
    %263 = vmatpush1.xpose.msra.mxu0 %v224
    %264 = vmatprep.subr.mxu0 %v229
    %265 = vmatpush1.xpose.msra.mxu0 %v228
    %266 = vmatprep.subr.mxu0 0.0
    %267 = vmatpush1.xpose.msra.mxu0 0.0
    %268 = vmatprep.subr.mxu0 0.0
    %269 = vmatpush1.xpose.msra.mxu0 0.0
    %270 = vmatprep.subr.mxu0 0.0
    %271 = vmatpush1.xpose.msra.mxu0 0.0
    %272 = vmatprep.subr.mxu0 0.0
    %273 = vmatpush1.xpose.msra.mxu0 0.0
    %274 = vmatprep.subr.mxu0 0.0
    %275 = vmatpush1.xpose.msra.mxu0 0.0
    %276 = vmatprep.subr.mxu0 0.0
    %277 = vmatpush1.xpose.msra.mxu0 0.0
    %278 = vmatprep.subr.mxu0 0.0
    %279 = vmatpush1.xpose.msra.mxu0 0.0
    %280 = vmatprep.subr.mxu0 0.0
    %281 = vmatpush1.xpose.msra.mxu0 0.0
    %282 = vmatprep.subr.mxu0 0.0
    %283 = vmatpush1.xpose.msra.mxu0 0.0
    %284 = vmatprep.subr.mxu0 0.0
    %285 = vmatpush1.xpose.msra.mxu0 0.0
    %286 = vmatprep.subr.mxu0 0.0
    %287 = vmatpush1.xpose.msra.mxu0 0.0
    %288 = vmatprep.subr.mxu0 0.0
    %289 = vmatpush1.xpose.msra.mxu0 0.0
    %290 = vmatprep.subr.mxu0 0.0
    %291 = vmatpush1.xpose.msra.mxu0 0.0
    %292 = vmatprep.subr.mxu0 0.0
    %293 = vmatpush1.xpose.msra.mxu0 0.0
    %294 = vmatprep.subr.mxu0 0.0
    %295 = vmatpush1.xpose.msra.mxu0 0.0
    %296 = vmatprep.subr.mxu0 0.0
    %297 = vmatpush1.xpose.msra.mxu0 0.0
    %298 = vmatprep.subr.mxu0 0.0
    %299 = vmatpush1.xpose.msra.mxu0 0.0
    %300 = vmatprep.subr.mxu0 0.0
    %301 = vmatpush1.xpose.msra.mxu0 0.0
    %302 = vmatprep.subr.mxu0 0.0
    %303 = vmatpush1.xpose.msra.mxu0 0.0
    %304 = vmatprep.subr.mxu0 0.0
    %305 = vmatpush1.xpose.msra.mxu0 0.0
    %306 = vmatprep.subr.mxu0 0.0
    %307 = vmatpush1.xpose.msra.mxu0 0.0
    %308 = vmatprep.subr.mxu0 0.0
    %309 = vmatpush1.xpose.msra.mxu0 0.0
    %310 = vmatprep.subr.mxu0 0.0
    %311 = vmatpush1.xpose.msra.mxu0 0.0
    %312 = vmatprep.subr.mxu0 0.0
    %313 = vmatpush1.xpose.msra.mxu0 0.0
    %314 = vmatprep.subr.mxu0 0.0
    %315 = vmatpush1.xpose.msra.mxu0 0.0
    %316 = vmatprep.subr.mxu0 0.0
    %317 = vmatpush1.xpose.msra.mxu0 0.0
    %318 = vmatprep.subr.mxu0 0.0
    %319 = vmatpush1.xpose.msra.mxu0 0.0
    %320 = vmatprep.subr.mxu0 0.0
    %321 = vmatpush1.xpose.msra.mxu0 0.0
    %322 = vmatprep.mubr.f32.mxu0 %v255
    %323 = vmatmul.mubr.f32.gmra.mrb[0].mxu0 %v254
    %v324 = vpop.f32.mrb[0].mxu0
    %v325 = vadd.f32 0.0, %v324
    %v326 = vpop.f32.mrb[0].mxu0
    %327 = vdwg.mxu0
    %328 = vmatprep.subr.mxu0 %v219
    %329 = vmatpush1.xpose.msra.mxu0 %v218
    %330 = vmatprep.subr.mxu0 %v223
    %331 = vmatpush1.xpose.msra.mxu0 %v222
    %332 = vmatprep.subr.mxu0 %v227
    %333 = vmatpush1.xpose.msra.mxu0 %v226
    %334 = vmatprep.subr.mxu0 %v231
    %335 = vmatpush1.xpose.msra.mxu0 %v230
    %336 = vmatprep.subr.mxu0 0.0
    %337 = vmatpush1.xpose.msra.mxu0 0.0
    %338 = vmatprep.subr.mxu0 0.0
    %339 = vmatpush1.xpose.msra.mxu0 0.0
    %340 = vmatprep.subr.mxu0 0.0
    %341 = vmatpush1.xpose.msra.mxu0 0.0
    %342 = vmatprep.subr.mxu0 0.0
    %343 = vmatpush1.xpose.msra.mxu0 0.0
    %344 = vmatprep.subr.mxu0 0.0
    %345 = vmatpush1.xpose.msra.mxu0 0.0
    %346 = vmatprep.subr.mxu0 0.0
    %347 = vmatpush1.xpose.msra.mxu0 0.0
    %348 = vmatprep.subr.mxu0 0.0
    %349 = vmatpush1.xpose.msra.mxu0 0.0
    %350 = vmatprep.subr.mxu0 0.0
    %351 = vmatpush1.xpose.msra.mxu0 0.0
    %352 = vmatprep.subr.mxu0 0.0
    %353 = vmatpush1.xpose.msra.mxu0 0.0
    %354 = vmatprep.subr.mxu0 0.0
    %355 = vmatpush1.xpose.msra.mxu0 0.0
    %356 = vmatprep.subr.mxu0 0.0
    %357 = vmatpush1.xpose.msra.mxu0 0.0
    %358 = vmatprep.subr.mxu0 0.0
    %359 = vmatpush1.xpose.msra.mxu0 0.0
    %360 = vmatprep.subr.mxu0 0.0
    %361 = vmatpush1.xpose.msra.mxu0 0.0
    %362 = vmatprep.subr.mxu0 0.0
    %363 = vmatpush1.xpose.msra.mxu0 0.0
    %364 = vmatprep.subr.mxu0 0.0
    %365 = vmatpush1.xpose.msra.mxu0 0.0
    %366 = vmatprep.subr.mxu0 0.0
    %367 = vmatpush1.xpose.msra.mxu0 0.0
    %368 = vmatprep.subr.mxu0 0.0
    %369 = vmatpush1.xpose.msra.mxu0 0.0
    %370 = vmatprep.subr.mxu0 0.0
    %371 = vmatpush1.xpose.msra.mxu0 0.0
    %372 = vmatprep.subr.mxu0 0.0
    %373 = vmatpush1.xpose.msra.mxu0 0.0
    %374 = vmatprep.subr.mxu0 0.0
    %375 = vmatpush1.xpose.msra.mxu0 0.0
    %376 = vmatprep.subr.mxu0 0.0
    %377 = vmatpush1.xpose.msra.mxu0 0.0
    %378 = vmatprep.subr.mxu0 0.0
    %379 = vmatpush1.xpose.msra.mxu0 0.0
    %380 = vmatprep.subr.mxu0 0.0
    %381 = vmatpush1.xpose.msra.mxu0 0.0
    %382 = vmatprep.subr.mxu0 0.0
    %383 = vmatpush1.xpose.msra.mxu0 0.0
    %384 = vmatprep.subr.mxu0 0.0
    %385 = vmatpush1.xpose.msra.mxu0 0.0
    %386 = vmatprep.subr.mxu0 0.0
    %387 = vmatpush1.xpose.msra.mxu0 0.0
    %388 = vmatprep.subr.mxu0 0.0
    %389 = vmatpush1.xpose.msra.mxu0 0.0
    %390 = vmatprep.subr.mxu0 0.0
    %391 = vmatpush1.xpose.msra.mxu0 0.0
    %392 = vmatprep.mubr.f32.mxu0 %v257
    %393 = vmatmul.mubr.f32.gmra.mrb[0].mxu0 %v256
    %v394 = vpop.f32.mrb[0].mxu0
    %v395 = vadd.f32 %v325, %v394
    %v396 = vpop.f32.mrb[0].mxu0
    %397 = vdwg.mxu0
    %v398 = vlaneseq
    %v399 = vshrl.u32 %v398, 7
    %v400 = vsub.s32 0, %v399
    %v401 = vrot.slane %v20, %v400
    %vm402 = vcmask 261120
    %v404 = vsel %vm402, %v395, 0
    %406 = vmatprep.subr.mxu0 0.0
    %407 = vmatpush1.msra.mxu0 %v16
    %408 = vmatprep.subr.mxu0 0.0
    %409 = vmatpush1.msra.mxu0 %v17
    %410 = vmatprep.subr.mxu0 0.0
    %411 = vmatpush1.msra.mxu0 %v18
    %412 = vmatprep.subr.mxu0 0.0
    %413 = vmatpush1.msra.mxu0 %v19
    %414 = vmatprep.subr.mxu0 0.0
    %415 = vmatpush1.msra.mxu0 0.0
    %416 = vmatprep.subr.mxu0 0.0
    %417 = vmatpush1.msra.mxu0 0.0
    %418 = vmatprep.subr.mxu0 0.0
    %419 = vmatpush1.msra.mxu0 0.0
    %420 = vmatprep.subr.mxu0 0.0
    %421 = vmatpush1.msra.mxu0 0.0
    %422 = vmatprep.subr.mxu0 0.0
    %423 = vmatpush1.msra.mxu0 0.0
    %424 = vmatprep.subr.mxu0 0.0
    %425 = vmatpush1.msra.mxu0 0.0
    %426 = vmatprep.subr.mxu0 0.0
    %427 = vmatpush1.msra.mxu0 0.0
    %428 = vmatprep.subr.mxu0 0.0
    %429 = vmatpush1.msra.mxu0 0.0
    %430 = vmatprep.subr.mxu0 0.0
    %431 = vmatpush1.msra.mxu0 0.0
    %432 = vmatprep.subr.mxu0 0.0
    %433 = vmatpush1.msra.mxu0 0.0
    %434 = vmatprep.subr.mxu0 0.0
    %435 = vmatpush1.msra.mxu0 0.0
    %436 = vmatprep.subr.mxu0 0.0
    %437 = vmatpush1.msra.mxu0 0.0
    %438 = vmatprep.subr.mxu0 0.0
    %439 = vmatpush1.msra.mxu0 0.0
    %440 = vmatprep.subr.mxu0 0.0
    %441 = vmatpush1.msra.mxu0 0.0
    %442 = vmatprep.subr.mxu0 0.0
    %443 = vmatpush1.msra.mxu0 0.0
    %444 = vmatprep.subr.mxu0 0.0
    %445 = vmatpush1.msra.mxu0 0.0
    %446 = vmatprep.subr.mxu0 0.0
    %447 = vmatpush1.msra.mxu0 0.0
    %448 = vmatprep.subr.mxu0 0.0
    %449 = vmatpush1.msra.mxu0 0.0
    %450 = vmatprep.subr.mxu0 0.0
    %451 = vmatpush1.msra.mxu0 0.0
    %452 = vmatprep.subr.mxu0 0.0
    %453 = vmatpush1.msra.mxu0 0.0
    %454 = vmatprep.subr.mxu0 0.0
    %455 = vmatpush1.msra.mxu0 0.0
    %456 = vmatprep.subr.mxu0 0.0
    %457 = vmatpush1.msra.mxu0 0.0
    %458 = vmatprep.subr.mxu0 0.0
    %459 = vmatpush1.msra.mxu0 0.0
    %460 = vmatprep.subr.mxu0 0.0
    %461 = vmatpush1.msra.mxu0 0.0
    %462 = vmatprep.subr.mxu0 0.0
    %463 = vmatpush1.msra.mxu0 0.0
    %464 = vmatprep.subr.mxu0 0.0
    %465 = vmatpush1.msra.mxu0 0.0
    %466 = vmatprep.subr.mxu0 0.0
    %467 = vmatpush1.msra.mxu0 0.0
    %468 = vmatprep.subr.mxu0 0.0
    %469 = vmatpush1.msra.mxu0 0.0
    %470 = vmatprep.mubr.f32.mxu0 0.0
    %471 = vmatmul.mubr.f32.gmra.mrb[0].mxu0 %v404
    %v472 = vpop.f32.mrb[0].mxu0
    %v473 = vadd.f32 %v401, %v472
    %v474 = vpop.f32.mrb[0].mxu0
    %475 = vdwg.mxu0
    %vm476 = vcmask 58368
    %v477 = vsel %vm476, %v473, -inf
    %478 = vmax.xlane.f32.xlu0 %v477
    %v479 = vpop.xlane.xlu0 %478
    %v480 = vsub.f32 %v473, %v479
    %v481 = vmul.f32 %v480, 1.442695
    %v482 = vpow.pop %v481
    %v483 = vsel %vm476, %v482, 0.0
    %484 = vadd.xlane.f32.xlu0 %v483
    %v485 = vpop.xlane.xlu0 %484
    %v486 = vrcp.pop %v485
    %v487 = vmul.f32 %v482, %v486
    %488 = vst.msk [vmem:[#allocation2] sm:$0x3] %vm476, %v487
    // Predicated region
    $region10: #{infer.1} parent=1 // pred_check
      _
    $region11: #{infer.1} parent=1 // pred_check_branch
      %490 = sbr.rel (0) target = $region13
    $region12: #{infer.1} parent=1 // pred_region
      %s492 = ssub.s32 32, 32
      %493 = vsyncadd [#allocation3], %s492
      %s495 = sshll.u32 [#allocation2], 4
      %s496 = int_to_ptr.vmem [resolvable:$true] %s495
      %498 = dma.vmem_to_hbm [thread:$0]  %s496, 32, %s2, [#allocation3]
    $region13: #{infer.1} parent=1 // pred_fallthru
      _
    // Predicated region
    $region14: #{infer.1} parent=1 // pred_check
      _
    $region15: #{infer.1} parent=1 // pred_check_branch
      %500 = sbr.rel (0) target = $region17
    $region16: #{infer.1} parent=1 // pred_region
      %501 = dma.done [#allocation3], 32
    $region17: #{infer.1} parent=1 // pred_fallthru
      _
    %502 = vsyncpa [#allocation3], 1

</llo_original>
